<compile_context>
chip_gen: v6e
topology: v6e:2x2x1
jax: 0.10.0
libtpu: 0.0.40
codegen_flags: <defaults>
</compile_context>

<pallas_src>
import functools

import jax
import jax.numpy as jnp
from jax import lax
from jax.experimental import pallas as pl
from jax.experimental.pallas import tpu as pltpu

LANES = 128
MAX_TILE_ROWS = 8192        # (8192, 128) f32 = 4 MiB per input block
CHUNK_ROWS = 512            # in-kernel sub-chunk: (512, 128) f32 temporaries only
ACC_ROWS = 64               # lane-dense accumulator height (8 vregs -> 8 add chains)
VMEM_LIMIT_BYTES = 40 * 1024 * 1024


class StandardScaler:
    """Deterministic synthetic scaler (matches the torch scaler interface)."""

    def __init__(self, mean, std):
        self.mean = float(mean)
        self.std = float(std)

    def inverse_transform(self, x):
        return x * self.std + self.mean


def _num_tensorcores():
    """Best-effort TensorCores-per-chip count (v4/v5p megacore, v7x: 2).

    A wrong answer only changes performance, never correctness: on a 1-TC chip
    a 2-way split is just a serial loop whose duplicate tile is compute-skipped.
    """
    try:
        kind = jax.devices()[0].device_kind.lower()
    except Exception:
        return 1
    for tag in ("v4", "v5p", "v7"):
        if tag in kind:
            return 2
    return 1


def _column_sums(x, max_rows):
    """Reduce an (R, LANES) f32 chunk to (r_out, LANES) column partial sums.

    r_out is the largest of {max_rows, 8, 1} dividing R, keeping the adds
    spread over several independent vreg chains whenever possible.
    """
    r = x.shape[0]
    if r >= max_rows and r % max_rows == 0:
        return jnp.sum(x.reshape(-1, max_rows, LANES), axis=0), max_rows
    if r >= 8 and r % 8 == 0:
        return jnp.sum(x.reshape(-1, 8, LANES), axis=0), 8
    return jnp.sum(x, axis=0, keepdims=True), 1


def _loss_kernel(p_ref, l_ref, sum_ref, cnt_ref, *, loss_type, thresh, flip_cmp,
                 use_mask, valid_rows, tile_rows, tiles_per_core):
    c = pl.program_id(0)          # TensorCore shard   ("parallel")
    j = pl.program_id(1)          # reduction step     ("arbitrary")

    @pl.when(j == 0)
    def _init():
        sum_ref[...] = jnp.zeros_like(sum_ref)
        cnt_ref[...] = jnp.zeros_like(cnt_ref)

    tile = c * tiles_per_core + j
    # Rows of this tile backed by real data: == tile_rows for interior tiles,
    # in (0, tile_rows) for the single ragged edge tile, <= 0 for a clamped
    # duplicate tile of the 2-core split (compute skipped entirely).
    rows_left = valid_rows - tile * tile_rows

    def accumulate(start, n_rows, row_bound=None):
        """Process rows [start, start + n_rows) of the tile (static slice)."""
        p = p_ref[pl.ds(start, n_rows), :].astype(jnp.float32)
        l = l_ref[pl.ds(start, n_rows), :].astype(jnp.float32)

        mask = None
        if use_mask:
            # (labels * std + mean) > mask_value, rewritten on the raw labels.
            mask = (l < thresh) if flip_cmp else (l > thresh)
        if row_bound is not None:
            # Row-granularity validity -- only ever emitted for the edge tile.
            row_ids = lax.broadcasted_iota(jnp.int32, (n_rows, LANES), 0)
            row_ok = row_ids < row_bound
            mask = row_ok if mask is None else jnp.logical_and(mask, row_ok)

        diff = p - l                       # *std is folded into the final scale
        err = jnp.abs(diff) if loss_type == "mae" else diff * diff
        if mask is not None:
            err = jnp.where(mask, err, 0.0)

        red, r_out = _column_sums(err, ACC_ROWS)
        sum_ref[pl.ds(0, r_out), :] = sum_ref[pl.ds(0, r_out), :] + red
        if use_mask:
            red_c, rc_out = _column_sums(mask.astype(jnp.float32), ACC_ROWS)
            cnt_ref[pl.ds(0, rc_out), :] = cnt_ref[pl.ds(0, rc_out), :] + red_c

    is_full = rows_left >= tile_rows

    @pl.when(is_full)
    def _full_tile():
        # Fast path: every row holds real data -> no index masking at all.
        for start in range(0, tile_rows, CHUNK_ROWS):
            accumulate(start, min(CHUNK_ROWS, tile_rows - start))

    @pl.when(jnp.logical_and(rows_left > 0, jnp.logical_not(is_full)))
    def _edge_tile():
        # Ragged edge tile: Pallas-padded rows past `rows_left` hold
        # unspecified data; mask them at row granularity, skipping chunks that
        # lie entirely past the end.
        for start in range(0, tile_rows, CHUNK_ROWS):
            n_rows = min(CHUNK_ROWS, tile_rows - start)

            @pl.when(start < rows_left)
            def _chunk(start=start, n_rows=n_rows):
                accumulate(start, n_rows, row_bound=rows_left - start)


class RegressionLoss:
    def __init__(self, scaler, mask_value=1e-05, loss_type="mae"):
        if loss_type not in ("mae", "mse"):
            raise Exception("Illegal Loss Function's Name.")
        self._scaler = scaler
        self._mask_value = mask_value
        self._loss_type = loss_type

    def __call__(self, preds, labels):
        return self.forward(preds, labels)

    def forward(self, preds, labels):
        mean = float(self._scaler.mean)
        std = float(self._scaler.std)

        preds_f = jnp.ravel(preds)
        labels_f = jnp.ravel(labels)
        # Keep native f32 / bf16 so the kernel reads the fewest HBM bytes.
        if preds_f.dtype.name not in ("float32", "bfloat16"):
            preds_f = preds_f.astype(jnp.float32)
        if labels_f.dtype.name not in ("float32", "bfloat16"):
            labels_f = labels_f.astype(jnp.float32)

        n = int(preds_f.shape[0])
        if int(labels_f.shape[0]) != n:
            raise ValueError("preds and labels must have the same number of elements")

        # Fold the inverse transform into a raw-label threshold + final scale:
        #   (p*std+mean) - (l*std+mean) = (p-l)*std
        #   (l*std+mean) > mask_value  <=>  l > (mask_value-mean)/std   (std>0)
        use_mask = self._mask_value is not None
        flip_cmp = False
        thresh = 0.0
        if use_mask:
            if std > 0.0:
                thresh = (self._mask_value - mean) / std
            elif std < 0.0:
                thresh = (self._mask_value - mean) / std
                flip_cmp = True
            else:  # std == 0: the mask is constant everywhere
                thresh = -float("inf") if mean > self._mask_value else float("inf")
        scale = abs(std) if self._loss_type == "mae" else std * std

        # The < 128-elem lane tail is folded in with tiny pure-JAX math so the
        # big arrays are never padded / copied when n is lane aligned.
        n_main = (n // LANES) * LANES
        rows = n_main // LANES

        tail_sum = jnp.float32(0.0)
        tail_cnt = jnp.float32(0.0)
        if n_main < n:
            tp = preds_f[n_main:].astype(jnp.float32)
            tl = labels_f[n_main:].astype(jnp.float32)
            tdiff = tp - tl
            terr = jnp.abs(tdiff) if self._loss_type == "mae" else tdiff * tdiff
            if use_mask:
                tmask = (tl < thresh) if flip_cmp else (tl > thresh)
                tail_sum = jnp.sum(jnp.where(tmask, terr, 0.0))
                tail_cnt = jnp.sum(tmask.astype(jnp.float32))
            else:
                tail_sum = jnp.sum(terr)

        if rows == 0:
            # Fewer than 128 elements: nothing for the kernel to do.
            total_cnt = tail_cnt if use_mask else jnp.float32(n)
            return tail_sum * jnp.float32(scale) / total_cnt

        if n_main != n:
            # TODO(synk): this prefix slice is one extra HBM read+write of the
            # (rare) non-lane-aligned inputs; a fully zero-copy path would need
            # a 1-D-blocked kernel.
            preds_main = preds_f[:n_main]
            labels_main = labels_f[:n_main]
        else:
            preds_main = preds_f          # zero-copy reshape below
            labels_main = labels_f

        preds_2d = preds_main.reshape(rows, LANES)
        labels_2d = labels_main.reshape(rows, LANES)

        tile_rows = min(MAX_TILE_ROWS, rows)
        total_tiles = pl.cdiv(rows, tile_rows)
        num_cores = _num_tensorcores() if total_tiles > 1 else 1
        tiles_per_core = pl.cdiv(total_tiles, num_cores)
        need_clamp = num_cores * tiles_per_core != total_tiles

        def data_map(c, j):
            t = c * tiles_per_core + j
            if need_clamp:
                # Keep the DMA in bounds; the duplicated tile's compute is
                # skipped in-kernel (rows_left <= 0).
                t = jnp.minimum(t, total_tiles - 1)
            return (t, 0)

        kernel = functools.partial(
            _loss_kernel,
            loss_type=self._loss_type,
            thresh=float(thresh),
            flip_cmp=flip_cmp,
            use_mask=use_mask,
            valid_rows=rows,
            tile_rows=tile_rows,
            tiles_per_core=tiles_per_core,
        )

        part_sum, part_cnt = pl.pallas_call(
            kernel,
            out_shape=(
                jax.ShapeDtypeStruct((num_cores, ACC_ROWS, LANES), jnp.float32),
                jax.ShapeDtypeStruct((num_cores, ACC_ROWS, LANES), jnp.float32),
            ),
            grid_spec=pltpu.PrefetchScalarGridSpec(
                num_scalar_prefetch=0,
                grid=(num_cores, tiles_per_core),
                in_specs=[
                    pl.BlockSpec((tile_rows, LANES), data_map),
                    pl.BlockSpec((tile_rows, LANES), data_map),
                ],
                out_specs=[
                    pl.BlockSpec((None, ACC_ROWS, LANES), lambda c, j: (c, 0, 0)),
                    pl.BlockSpec((None, ACC_ROWS, LANES), lambda c, j: (c, 0, 0)),
                ],
            ),
            compiler_params=pltpu.CompilerParams(
                dimension_semantics=("parallel", "arbitrary"),
                vmem_limit_bytes=VMEM_LIMIT_BYTES,
            ),
        )(preds_2d, labels_2d)

        total_sum = jnp.sum(part_sum) + tail_sum
        if use_mask:
            total_cnt = jnp.sum(part_cnt) + tail_cnt
        else:
            total_cnt = jnp.float32(n)
        # NOTE: like the torch module, an all-False mask yields NaN (0/0).
        return total_sum * jnp.float32(scale) / total_cnt


def _reference(preds, labels, mean, std, mask_value, loss_type):
    p = preds.astype(jnp.float32) * std + mean
    l = labels.astype(jnp.float32) * std + mean
    diff = p - l
    err = jnp.abs(diff) if loss_type == "mae" else jnp.square(diff)
    if mask_value is None:
        return jnp.mean(err)
    mask = l > mask_value
    return jnp.sum(jnp.where(mask, err, 0.0)) / jnp.sum(mask.astype(jnp.float32))


if __name__ == "__main__":
    scaler = StandardScaler(mean=5.0, std=2.0)
    key = jax.random.PRNGKey(0)
    k1, k2, k3, k4, k5, k6 = jax.random.split(key, 6)

    # Small smoke test: (B, T, N, C) = (2, 8, 16, 4) -> 1024 elements.
    preds = jax.random.normal(k1, (2, 8, 16, 4), dtype=jnp.float32)
    labels = jax.random.normal(k2, (2, 8, 16, 4), dtype=jnp.float32)

    for loss_type in ("mae", "mse"):
        loss = RegressionLoss(scaler, mask_value=1e-05, loss_type=loss_type)(preds, labels)
        jax.block_until_ready(loss)
        ref = _reference(preds, labels, scaler.mean, scaler.std, 1e-05, loss_type)
        assert jnp.allclose(loss, ref, rtol=1e-5, atol=1e-6), (loss_type, loss, ref)

    # mask_value=None path (no masking at all).
    loss_nm = RegressionLoss(scaler, mask_value=None, loss_type="mae")(preds, labels)
    jax.block_until_ready(loss_nm)
    ref_nm = _reference(preds, labels, scaler.mean, scaler.std, None, "mae")
    assert jnp.allclose(loss_nm, ref_nm, rtol=1e-5, atol=1e-6), (loss_nm, ref_nm)

    # Non-lane-aligned element count: exercises the pure-JAX < 128-elem tail
    # and a full-dims (rows, 128) single-tile block with rows not % 8 == 0.
    preds3 = jax.random.normal(k3, (3, 7, 11, 5), dtype=jnp.float32)     # 1155 elems
    labels3 = jax.random.normal(k4, (3, 7, 11, 5), dtype=jnp.float32)
    loss3 = RegressionLoss(scaler, mask_value=1e-05, loss_type="mae")(preds3, labels3)
    jax.block_until_ready(loss3)
    ref3 = _reference(preds3, labels3, scaler.mean, scaler.std, 1e-05, "mae")
    assert jnp.allclose(loss3, ref3, rtol=1e-5, atol=1e-6), (loss3, ref3)

    # Larger shape: multiple (8192, 128) tiles, a ragged edge tile and (on
    # multi-TensorCore chips) the 2-way core split with a skipped duplicate.
    preds2 = jax.random.normal(k5, (64, 12, 325, 12), dtype=jnp.float32)
    labels2 = jax.random.normal(k6, (64, 12, 325, 12), dtype=jnp.float32)
    loss2 = RegressionLoss(scaler, mask_value=1e-05, loss_type="mse")(preds2, labels2)
    jax.block_until_ready(loss2)
    ref2 = _reference(preds2, labels2, scaler.mean, scaler.std, 1e-05, "mse")
    assert jnp.allclose(loss2, ref2, rtol=1e-4, atol=1e-5), (loss2, ref2)

    print("KERNEL_OK")
</pallas_src>

<mosaic_0001>
module attributes {stable_mosaic.version = 11 : i64} {
  func.func @_loss_kernel(%arg0: i32, %arg1: i32, %arg2: memref<8x128xf32, #tpu.memory_space<vmem>>, %arg3: memref<8x128xf32, #tpu.memory_space<vmem>>, %arg4: memref<1x64x128xf32, #tpu.memory_space<vmem>>, %arg5: memref<1x64x128xf32, #tpu.memory_space<vmem>>) attributes {dimension_semantics = [#tpu.dimension_semantics<parallel>, #tpu.dimension_semantics<arbitrary>], iteration_bounds = array<i64: 1, 1>, scalar_prefetch = 0 : i64, scratch_operands = 0 : i64, tpu.core_type = #tpu.core_type<tc>, window_params = [{transform_indices = @transform_0, window_bounds = array<i64: 8, 128>}, {transform_indices = @transform_1, window_bounds = array<i64: 8, 128>}, {transform_indices = @transform_2, window_bounds = array<i64: 1, 64, 128>}, {transform_indices = @transform_3, window_bounds = array<i64: 1, 64, 128>}]} {
    %c0_i32 = arith.constant 0 : i32
    %0 = arith.cmpi eq, %arg1, %c0_i32 : i32
    %1 = arith.extui %0 : i1 to i32
    %c0_i32_0 = arith.constant 0 : i32
    %2 = arith.cmpi ne, %1, %c0_i32_0 : i32
    scf.if %2 {
      %cst = arith.constant 0.000000e+00 : f32
      %15 = vector.broadcast %cst : f32 to vector<64x128xf32>
      %c0 = arith.constant 0 : index
      %c0_6 = arith.constant 0 : index
      %c0_7 = arith.constant 0 : index
      %16 = vector.load %arg4[%c0, %c0_6, %c0_7] : memref<1x64x128xf32, #tpu.memory_space<vmem>>, vector<1x64x128xf32>
      %17 = vector.shape_cast %16 : vector<1x64x128xf32> to vector<64x128xf32>
      %18 = vector.shape_cast %15 : vector<64x128xf32> to vector<1x64x128xf32>
      tpu.vector_store %arg4[%c0, %c0_6, %c0_7], %18 {strides = array<i32>} : memref<1x64x128xf32, #tpu.memory_space<vmem>>, vector<1x64x128xf32>,
      %cst_8 = arith.constant 0.000000e+00 : f32
      %19 = vector.broadcast %cst_8 : f32 to vector<64x128xf32>
      %c0_9 = arith.constant 0 : index
      %c0_10 = arith.constant 0 : index
      %c0_11 = arith.constant 0 : index
      %20 = vector.load %arg5[%c0_9, %c0_10, %c0_11] : memref<1x64x128xf32, #tpu.memory_space<vmem>>, vector<1x64x128xf32>
      %21 = vector.shape_cast %20 : vector<1x64x128xf32> to vector<64x128xf32>
      %22 = vector.shape_cast %19 : vector<64x128xf32> to vector<1x64x128xf32>
      tpu.vector_store %arg5[%c0_9, %c0_10, %c0_11], %22 {strides = array<i32>} : memref<1x64x128xf32, #tpu.memory_space<vmem>>, vector<1x64x128xf32>,
    } else {
    }
    %c1_i32 = arith.constant 1 : i32
    %3 = arith.muli %arg0, %c1_i32 : i32
    %4 = arith.addi %3, %arg1 : i32
    %c8_i32 = arith.constant 8 : i32
    %5 = arith.muli %4, %c8_i32 : i32
    %c8_i32_1 = arith.constant 8 : i32
    %6 = arith.subi %c8_i32_1, %5 : i32
    %c8_i32_2 = arith.constant 8 : i32
    %7 = arith.cmpi sge, %6, %c8_i32_2 : i32
    %8 = arith.extui %7 : i1 to i32
    %c0_i32_3 = arith.constant 0 : i32
    %9 = arith.cmpi ne, %8, %c0_i32_3 : i32
    scf.if %9 {
      %c0 = arith.constant 0 : index
      %c0_6 = arith.constant 0 : index
      %15 = vector.load %arg2[%c0, %c0_6] : memref<8x128xf32, #tpu.memory_space<vmem>>, vector<8x128xf32>
      %c0_7 = arith.constant 0 : index
      %c0_8 = arith.constant 0 : index
      %16 = vector.load %arg3[%c0_7, %c0_8] : memref<8x128xf32, #tpu.memory_space<vmem>>, vector<8x128xf32>
      %cst = arith.constant -2.49999499 : f32
      %17 = vector.broadcast %cst : f32 to vector<8x128xf32>
      %18 = arith.cmpf ogt, %16, %17 : vector<8x128xf32>
      %19 = arith.subf %15, %16 : vector<8x128xf32>
      %20 = math.absf %19 : vector<8x128xf32>
      %cst_9 = arith.constant 0.000000e+00 : f32
      %21 = vector.broadcast %cst_9 : f32 to vector<8x128xf32>
      %22 = arith.select %18, %20, %21 : vector<8x128xi1>, vector<8x128xf32>
      %23 = vector.shape_cast %22 : vector<8x128xf32> to vector<1x8x128xf32>
      %cst_10 = arith.constant dense<0.000000e+00> : vector<8x128xf32>
      %24 = vector.multi_reduction <add>, %23, %cst_10 [0] : vector<1x8x128xf32> to vector<8x128xf32>
      %c0_11 = arith.constant 0 : index
      %c0_12 = arith.constant 0 : index
      %c0_13 = arith.constant 0 : index
      %25 = vector.load %arg4[%c0_11, %c0_12, %c0_13] : memref<1x64x128xf32, #tpu.memory_space<vmem>>, vector<1x8x128xf32>
      %26 = vector.shape_cast %25 : vector<1x8x128xf32> to vector<8x128xf32>
      %27 = arith.addf %26, %24 : vector<8x128xf32>
      %c0_14 = arith.constant 0 : index
      %c0_15 = arith.constant 0 : index
      %c0_16 = arith.constant 0 : index
      %28 = vector.load %arg4[%c0_14, %c0_15, %c0_16] : memref<1x64x128xf32, #tpu.memory_space<vmem>>, vector<1x8x128xf32>
      %29 = vector.shape_cast %28 : vector<1x8x128xf32> to vector<8x128xf32>
      %30 = vector.shape_cast %27 : vector<8x128xf32> to vector<1x8x128xf32>
      tpu.vector_store %arg4[%c0_14, %c0_15, %c0_16], %30 {strides = array<i32>} : memref<1x64x128xf32, #tpu.memory_space<vmem>>, vector<1x8x128xf32>,
      %31 = arith.extui %18 : vector<8x128xi1> to vector<8x128xi32>
      %32 = arith.sitofp %31 : vector<8x128xi32> to vector<8x128xf32>
      %33 = vector.shape_cast %32 : vector<8x128xf32> to vector<1x8x128xf32>
      %cst_17 = arith.constant dense<0.000000e+00> : vector<8x128xf32>
      %34 = vector.multi_reduction <add>, %33, %cst_17 [0] : vector<1x8x128xf32> to vector<8x128xf32>
      %c0_18 = arith.constant 0 : index
      %c0_19 = arith.constant 0 : index
      %c0_20 = arith.constant 0 : index
      %35 = vector.load %arg5[%c0_18, %c0_19, %c0_20] : memref<1x64x128xf32, #tpu.memory_space<vmem>>, vector<1x8x128xf32>
      %36 = vector.shape_cast %35 : vector<1x8x128xf32> to vector<8x128xf32>
      %37 = arith.addf %36, %34 : vector<8x128xf32>
      %c0_21 = arith.constant 0 : index
      %c0_22 = arith.constant 0 : index
      %c0_23 = arith.constant 0 : index
      %38 = vector.load %arg5[%c0_21, %c0_22, %c0_23] : memref<1x64x128xf32, #tpu.memory_space<vmem>>, vector<1x8x128xf32>
      %39 = vector.shape_cast %38 : vector<1x8x128xf32> to vector<8x128xf32>
      %40 = vector.shape_cast %37 : vector<8x128xf32> to vector<1x8x128xf32>
      tpu.vector_store %arg5[%c0_21, %c0_22, %c0_23], %40 {strides = array<i32>} : memref<1x64x128xf32, #tpu.memory_space<vmem>>, vector<1x8x128xf32>,
    } else {
    }
    %c0_i32_4 = arith.constant 0 : i32
    %10 = arith.cmpi sgt, %6, %c0_i32_4 : i32
    %true = arith.constant true
    %11 = arith.xori %7, %true : i1
    %12 = arith.andi %10, %11 : i1
    %13 = arith.extui %12 : i1 to i32
    %c0_i32_5 = arith.constant 0 : i32
    %14 = arith.cmpi ne, %13, %c0_i32_5 : i32
    scf.if %14 {
      %c0_i32_6 = arith.constant 0 : i32
      %15 = arith.cmpi sgt, %6, %c0_i32_6 : i32
      %16 = arith.extui %15 : i1 to i32
      %c0_i32_7 = arith.constant 0 : i32
      %17 = arith.cmpi ne, %16, %c0_i32_7 : i32
      scf.if %17 {
        %c0_i32_8 = arith.constant 0 : i32
        %18 = arith.subi %6, %c0_i32_8 : i32
        %c0 = arith.constant 0 : index
        %c0_9 = arith.constant 0 : index
        %19 = vector.load %arg2[%c0, %c0_9] : memref<8x128xf32, #tpu.memory_space<vmem>>, vector<8x128xf32>
        %c0_10 = arith.constant 0 : index
        %c0_11 = arith.constant 0 : index
        %20 = vector.load %arg3[%c0_10, %c0_11] : memref<8x128xf32, #tpu.memory_space<vmem>>, vector<8x128xf32>
        %cst = arith.constant -2.49999499 : f32
        %21 = vector.broadcast %cst : f32 to vector<8x128xf32>
        %22 = arith.cmpf ogt, %20, %21 : vector<8x128xf32>
        %23 = tpu.iota {dimensions = array<i32: 0>} : vector<8x128xi32>
        %24 = vector.broadcast %18 : i32 to vector<8x128xi32>
        %25 = arith.cmpi slt, %23, %24 : vector<8x128xi32>
        %26 = arith.andi %22, %25 : vector<8x128xi1>
        %27 = arith.subf %19, %20 : vector<8x128xf32>
        %28 = math.absf %27 : vector<8x128xf32>
        %cst_12 = arith.constant 0.000000e+00 : f32
        %29 = vector.broadcast %cst_12 : f32 to vector<8x128xf32>
        %30 = arith.select %26, %28, %29 : vector<8x128xi1>, vector<8x128xf32>
        %31 = vector.shape_cast %30 : vector<8x128xf32> to vector<1x8x128xf32>
        %cst_13 = arith.constant dense<0.000000e+00> : vector<8x128xf32>
        %32 = vector.multi_reduction <add>, %31, %cst_13 [0] : vector<1x8x128xf32> to vector<8x128xf32>
        %c0_14 = arith.constant 0 : index
        %c0_15 = arith.constant 0 : index
        %c0_16 = arith.constant 0 : index
        %33 = vector.load %arg4[%c0_14, %c0_15, %c0_16] : memref<1x64x128xf32, #tpu.memory_space<vmem>>, vector<1x8x128xf32>
        %34 = vector.shape_cast %33 : vector<1x8x128xf32> to vector<8x128xf32>
        %35 = arith.addf %34, %32 : vector<8x128xf32>
        %c0_17 = arith.constant 0 : index
        %c0_18 = arith.constant 0 : index
        %c0_19 = arith.constant 0 : index
        %36 = vector.load %arg4[%c0_17, %c0_18, %c0_19] : memref<1x64x128xf32, #tpu.memory_space<vmem>>, vector<1x8x128xf32>
        %37 = vector.shape_cast %36 : vector<1x8x128xf32> to vector<8x128xf32>
        %38 = vector.shape_cast %35 : vector<8x128xf32> to vector<1x8x128xf32>
        tpu.vector_store %arg4[%c0_17, %c0_18, %c0_19], %38 {strides = array<i32>} : memref<1x64x128xf32, #tpu.memory_space<vmem>>, vector<1x8x128xf32>,
        %39 = arith.extui %26 : vector<8x128xi1> to vector<8x128xi32>
        %40 = arith.sitofp %39 : vector<8x128xi32> to vector<8x128xf32>
        %41 = vector.shape_cast %40 : vector<8x128xf32> to vector<1x8x128xf32>
        %cst_20 = arith.constant dense<0.000000e+00> : vector<8x128xf32>
        %42 = vector.multi_reduction <add>, %41, %cst_20 [0] : vector<1x8x128xf32> to vector<8x128xf32>
        %c0_21 = arith.constant 0 : index
        %c0_22 = arith.constant 0 : index
        %c0_23 = arith.constant 0 : index
        %43 = vector.load %arg5[%c0_21, %c0_22, %c0_23] : memref<1x64x128xf32, #tpu.memory_space<vmem>>, vector<1x8x128xf32>
        %44 = vector.shape_cast %43 : vector<1x8x128xf32> to vector<8x128xf32>
        %45 = arith.addf %44, %42 : vector<8x128xf32>
        %c0_24 = arith.constant 0 : index
        %c0_25 = arith.constant 0 : index
        %c0_26 = arith.constant 0 : index
        %46 = vector.load %arg5[%c0_24, %c0_25, %c0_26] : memref<1x64x128xf32, #tpu.memory_space<vmem>>, vector<1x8x128xf32>
        %47 = vector.shape_cast %46 : vector<1x8x128xf32> to vector<8x128xf32>
        %48 = vector.shape_cast %45 : vector<8x128xf32> to vector<1x8x128xf32>
        tpu.vector_store %arg5[%c0_24, %c0_25, %c0_26], %48 {strides = array<i32>} : memref<1x64x128xf32, #tpu.memory_space<vmem>>, vector<1x8x128xf32>,
      } else {
      }
    } else {
    }
    return
  }
  func.func @transform_0(%arg0: i32, %arg1: i32) -> (i32, i32) {
    %c1_i32 = arith.constant 1 : i32
    %0 = arith.muli %arg0, %c1_i32 : i32
    %1 = arith.addi %0, %arg1 : i32
    %c0_i32 = arith.constant 0 : i32
    %c0_i32_0 = arith.constant 0 : i32
    return %1, %c0_i32 : i32, i32
  }
  func.func @transform_1(%arg0: i32, %arg1: i32) -> (i32, i32) {
    %c1_i32 = arith.constant 1 : i32
    %0 = arith.muli %arg0, %c1_i32 : i32
    %1 = arith.addi %0, %arg1 : i32
    %c0_i32 = arith.constant 0 : i32
    %c0_i32_0 = arith.constant 0 : i32
    return %1, %c0_i32 : i32, i32
  }
  func.func @transform_2(%arg0: i32, %arg1: i32) -> (i32, i32, i32) {
    %c0_i32 = arith.constant 0 : i32
    %c0_i32_0 = arith.constant 0 : i32
    %c0_i32_1 = arith.constant 0 : i32
    return %arg0, %c0_i32, %c0_i32_0 : i32, i32, i32
  }
  func.func @transform_3(%arg0: i32, %arg1: i32) -> (i32, i32, i32) {
    %c0_i32 = arith.constant 0 : i32
    %c0_i32_0 = arith.constant 0 : i32
    %c0_i32_1 = arith.constant 0 : i32
    return %arg0, %c0_i32, %c0_i32_0 : i32, i32, i32
  }
}

</mosaic_0001>

<llo_original>
// kernel: tpu_custom_call.1
$region0: #{tpu_custom_call.1}
  #allocation0 [shape = 'u32[]', space=smem, size = 0x4, offset = 0x4, fixed_abs, tag = 'smem constant byte address 0x4 - core index']
  #allocation1 [shape = 'u32[144,128]{1,0:T(1,128)}', space=vmem, size = 0x12000, scoped, tag = 'internal scratch']
  %s0 = inlined_call_operand.hbm [shape: f32[8,128], index: 0, kind: input, shape index: {}]
  %s1 = inlined_call_operand.hbm [shape: f32[8,128], index: 1, kind: input, shape index: {}]
  %s2 = inlined_call_operand.hbm [shape: f32[1,64,128], index: 2, kind: output, shape index: {0}]
  %s3 = inlined_call_operand.hbm [shape: f32[1,64,128], index: 3, kind: output, shape index: {1}]
  %4 = xla_tuple %s2, %s3
  %s5 = sld [smem:[#allocation0]]
  $region46: #{tpu_custom_call.1} parent=0
    _
  %s7 = ssub.s32 1, %s5
  %s8 = scalar_select 0, %s7, %s5
  $region1: #{tpu_custom_call.1} parent=0
    #allocation2 [shape = 'u8[4096]{0}', space=vmem, size = 0x1000, scoped, tag = 'input window, operand 0, single buffered']
    #allocation3 [shape = 's32[1]{0}', space=sflag, size = 0x4, scoped, tag = 'scoped memory for tpu_custom_call.1']
    #allocation4 [shape = 's32[1]{0}', space=sflag, size = 0x4, scoped, tag = 'scoped memory for tpu_custom_call.1']
    #allocation5 [shape = 'u8[4096]{0}', space=vmem, size = 0x1000, scoped, tag = 'input window, operand 1, single buffered']
    #allocation6 [shape = 's32[1]{0}', space=sflag, size = 0x4, scoped, tag = 'scoped memory for tpu_custom_call.1']
    #allocation7 [shape = 'u8[32768]{0}', space=vmem, size = 0x8000, scoped, tag = 'output window, operand 0, single buffered']
    #allocation8 [shape = 'u8[32768]{0}', space=vmem, size = 0x8000, scoped, tag = 'output window, operand 1, single buffered']
    #allocation9 [shape = 's32[1]{0}', space=sflag, size = 0x4, scoped, tag = 'scoped memory for tpu_custom_call.1']
    %9 = vsyncpa [#allocation3], 0
    %10 = vsyncpa [#allocation6], 0
    %11 = vsyncpa [#allocation4], 0
    %12 = vsyncpa [#allocation9], 0
    // Predicated region
    $region2: #{tpu_custom_call.1} parent=1 // pred_check
      _
    $region3: #{tpu_custom_call.1} parent=1 // pred_check_branch
      %14 = sbr.rel (0) target = $region5
    $region4: #{tpu_custom_call.1} parent=1 // pred_region
      %s15 = sadd.s32 0, 0
      %s17 = ssub.s32 128, 128
      %18 = vsyncadd [#allocation3], %s17
      %s19 = smul.addr %s15, 128
      %s20 = scalar_lea.hbm %s0, %s19
      %s22 = sshll.u32 [#allocation2], 4
      %s23 = int_to_ptr.vmem [resolvable:$true] %s22
      %25 = dma.hbm_to_vmem [thread:$0]  %s20, 128, %s23, [#allocation3]
    $region5: #{tpu_custom_call.1} parent=1 // pred_fallthru
      _
    // Predicated region
    $region6: #{tpu_custom_call.1} parent=1 // pred_check
      _
    $region7: #{tpu_custom_call.1} parent=1 // pred_check_branch
      %27 = sbr.rel (0) target = $region9
    $region8: #{tpu_custom_call.1} parent=1 // pred_region
      %s28 = sadd.s32 0, 0
      %s30 = ssub.s32 128, 128
      %31 = vsyncadd [#allocation6], %s30
      %s32 = smul.addr %s28, 128
      %s33 = scalar_lea.hbm %s1, %s32
      %s35 = sshll.u32 [#allocation5], 4
      %s36 = int_to_ptr.vmem [resolvable:$true] %s35
      %38 = dma.hbm_to_vmem [thread:$0]  %s33, 128, %s36, [#allocation6]
    $region9: #{tpu_custom_call.1} parent=1 // pred_fallthru
      _
    // Predicated region
    $region10: #{tpu_custom_call.1} parent=1 // pred_check
      _
    $region11: #{tpu_custom_call.1} parent=1 // pred_check_branch
      %40 = sbr.rel (0) target = $region13
    $region12: #{tpu_custom_call.1} parent=1 // pred_region
      %41 = dma.done [#allocation3], 128
    $region13: #{tpu_custom_call.1} parent=1 // pred_fallthru
      _
    // Predicated region
    $region14: #{tpu_custom_call.1} parent=1 // pred_check
      _
    $region15: #{tpu_custom_call.1} parent=1 // pred_check_branch
      %43 = sbr.rel (0) target = $region17
    $region16: #{tpu_custom_call.1} parent=1 // pred_region
      %44 = dma.done [#allocation6], 128
    $region17: #{tpu_custom_call.1} parent=1 // pred_fallthru
      _
    %s45 = sadd.s32 0, 0
    %s46 = sadd.s32 0, 0
    %p47 = scmp.eq.s32.totalorder 0, 0
    // Predicated region
    $region18: #{tpu_custom_call.1} parent=1 // pred_check
      %p48 = pneg %p47
    $region19: #{tpu_custom_call.1} parent=1 // pred_check_branch
      %50 = sbr.rel (%p48) target = $region21
    $region20: #{tpu_custom_call.1} parent=1 // pred_region
      %51 = vst [vmem:[#allocation7] sm:$0xff] 0.0
      %52 = vst [vmem:[#allocation7 + $0x8] sm:$0xff] 0.0
      %53 = vst [vmem:[#allocation7 + $0x10] sm:$0xff] 0.0
      %54 = vst [vmem:[#allocation7 + $0x18] sm:$0xff] 0.0
      %55 = vst [vmem:[#allocation7 + $0x20] sm:$0xff] 0.0
      %56 = vst [vmem:[#allocation7 + $0x28] sm:$0xff] 0.0
      %57 = vst [vmem:[#allocation7 + $0x30] sm:$0xff] 0.0
      %58 = vst [vmem:[#allocation7 + $0x38] sm:$0xff] 0.0
      %59 = vst [vmem:[#allocation8] sm:$0xff] 0.0
      %60 = vst [vmem:[#allocation8 + $0x8] sm:$0xff] 0.0
      %61 = vst [vmem:[#allocation8 + $0x10] sm:$0xff] 0.0
      %62 = vst [vmem:[#allocation8 + $0x18] sm:$0xff] 0.0
      %63 = vst [vmem:[#allocation8 + $0x20] sm:$0xff] 0.0
      %64 = vst [vmem:[#allocation8 + $0x28] sm:$0xff] 0.0
      %65 = vst [vmem:[#allocation8 + $0x30] sm:$0xff] 0.0
      %66 = vst [vmem:[#allocation8 + $0x38] sm:$0xff] 0.0
    $region21: #{tpu_custom_call.1} parent=1 // pred_fallthru
      _
    %s67 = sadd.s32 0, 0
    %s68 = smul.u32 %s67, 8
    %s69 = ssub.s32 8, %s68
    %p70 = scmp.ge.s32.totalorder %s69, 8
    // Predicated region
    $region22: #{tpu_custom_call.1} parent=1 // pred_check
      %p71 = pneg %p70
    $region23: #{tpu_custom_call.1} parent=1 // pred_check_branch
      %73 = sbr.rel (%p71) target = $region25
    $region24: #{tpu_custom_call.1} parent=1 // pred_region
      %v74 = vld [vmem:[#allocation2] sm:$0xff]
      %v75 = vld [vmem:[#allocation5] sm:$0xff]
      %vm76 = vcmp.gt.f32.partialorder %v75, -2.499995
      %v77 = vsub.f32 %v74, %v75
      %v78 = vand.u32 2147483647, %v77
      %v79 = vsel %vm76, %v78, 0.0
      %v80 = vadd.f32 %v79, 0.0
      %v81 = vld [vmem:[#allocation7] sm:$0xff]
      %v82 = vadd.f32 %v81, %v80
      %83 = vst [vmem:[#allocation7] sm:$0xff] %v82
      %v84 = vsel %vm76, 1, 0
      %v85 = vcvt.s32.f32 %v84
      %v86 = vadd.f32 %v85, 0.0
      %v87 = vld [vmem:[#allocation8] sm:$0xff]
      %v88 = vadd.f32 %v87, %v86
      %89 = vst [vmem:[#allocation8] sm:$0xff] %v88
    $region25: #{tpu_custom_call.1} parent=1 // pred_fallthru
      _
    %p90 = scmp.gt.s32.totalorder %s69, 0
    %p91 = scmp.lt.s32.totalorder %s69, 8
    %p92 = pnand %p90, %p91
    %p93 = pneg %p92
    // Predicated region
    $region26: #{tpu_custom_call.1} parent=1 // pred_check
      _
    $region27: #{tpu_custom_call.1} parent=1 // pred_check_branch
      %95 = sbr.rel (%p92) target = $region29
    $region28: #{tpu_custom_call.1} parent=1 // pred_region
      %v96 = vld [vmem:[#allocation2] sm:$0xff]
      %v97 = vld [vmem:[#allocation5] sm:$0xff]
      %vm98 = vcmp.gt.f32.partialorder %v97, -2.499995
      %v99 = vlaneseq
      %v100 = vshrl.u32 %v99, 7
      %v101 = vstv %s69
      %vm102 = vcmp.lt.s32.totalorder %v100, %v101
      %vm103 = vmand %vm98, %vm102
      %v104 = vsub.f32 %v96, %v97
      %v105 = vand.u32 2147483647, %v104
      %v106 = vsel %vm103, %v105, 0.0
      %v107 = vadd.f32 %v106, 0.0
      %v108 = vld [vmem:[#allocation7] sm:$0xff]
      %v109 = vadd.f32 %v108, %v107
      %110 = vst [vmem:[#allocation7] sm:$0xff] %v109
      %v111 = vsel %vm103, 1, 0
      %v112 = vcvt.s32.f32 %v111
      %v113 = vadd.f32 %v112, 0.0
      %v114 = vld [vmem:[#allocation8] sm:$0xff]
      %v115 = vadd.f32 %v114, %v113
      %116 = vst [vmem:[#allocation8] sm:$0xff] %v115
    $region29: #{tpu_custom_call.1} parent=1 // pred_fallthru
      _
    // Predicated region
    $region30: #{tpu_custom_call.1} parent=1 // pred_check
      _
    $region31: #{tpu_custom_call.1} parent=1 // pred_check_branch
      %118 = sbr.rel (0) target = $region33
    $region32: #{tpu_custom_call.1} parent=1 // pred_region
      %s120 = ssub.s32 1024, 1024
      %121 = vsyncadd [#allocation4], %s120
      %s122 = sshll.u32 [#allocation7], 4
      %s123 = int_to_ptr.vmem [resolvable:$true] %s122
      %128 = dma.vmem_to_hbm [thread:$0]  %s123, 1024, %s2, [#allocation4], 128, 128, 8
    $region33: #{tpu_custom_call.1} parent=1 // pred_fallthru
      _
    // Predicated region
    $region34: #{tpu_custom_call.1} parent=1 // pred_check
      _
    $region35: #{tpu_custom_call.1} parent=1 // pred_check_branch
      %130 = sbr.rel (0) target = $region37
    $region36: #{tpu_custom_call.1} parent=1 // pred_region
      %s132 = ssub.s32 1024, 1024
      %133 = vsyncadd [#allocation9], %s132
      %s134 = sshll.u32 [#allocation8], 4
      %s135 = int_to_ptr.vmem [resolvable:$true] %s134
      %140 = dma.vmem_to_hbm [thread:$0]  %s135, 1024, %s3, [#allocation9], 128, 128, 8
    $region37: #{tpu_custom_call.1} parent=1 // pred_fallthru
      _
    // Predicated region
    $region38: #{tpu_custom_call.1} parent=1 // pred_check
      _
    $region39: #{tpu_custom_call.1} parent=1 // pred_check_branch
      %142 = sbr.rel (0) target = $region41
    $region40: #{tpu_custom_call.1} parent=1 // pred_region
      %143 = dma.done [#allocation4], 1024
    $region41: #{tpu_custom_call.1} parent=1 // pred_fallthru
      _
    // Predicated region
    $region42: #{tpu_custom_call.1} parent=1 // pred_check
      _
    $region43: #{tpu_custom_call.1} parent=1 // pred_check_branch
      %145 = sbr.rel (0) target = $region45
    $region44: #{tpu_custom_call.1} parent=1 // pred_region
      %146 = dma.done [#allocation9], 1024
    $region45: #{tpu_custom_call.1} parent=1 // pred_fallthru
      _
    %147 = vsyncpa [#allocation3], 1
    %148 = vsyncpa [#allocation6], 1
    %149 = vsyncpa [#allocation4], 1
    %150 = vsyncpa [#allocation9], 1

</llo_original>
